<compile_context>
chip_gen: v5e
topology: v5e:2x2
jax: 0.10.0
libtpu: 0.0.40
codegen_flags: <defaults>
</compile_context>

<pallas_src>
import jax
import jax.numpy as jnp
from jax.experimental import pallas as pl
from jax.experimental.pallas import tpu as pltpu


def qnetwork_kernel(s_ref, a_ref, w1_ref, b1_ref, w2_ref, b2_ref,
                    w3_ref, b3_ref, out_ref, x_ref):
    n_obs = s_ref.shape[1]

    # Layer 1: Linear(n_obs + n_act -> H1) + ReLU.
    # Stack [state | action] in a VMEM scratch (pure on-chip round trip) so
    # the concatenated-feature matmul is ONE MXU pass against resident W1.
    x_ref[:, :n_obs] = s_ref[...]
    x_ref[:, n_obs:] = a_ref[...]
    h = (jnp.dot(x_ref[...].astype(jnp.bfloat16), w1_ref[...],
                 preferred_element_type=jnp.float32) + b1_ref[...])
    h = jnp.maximum(h, 0.0)

    # Layer 2: Linear(H1 -> H2) + ReLU.
    h = jnp.dot(h.astype(jnp.bfloat16), w2_ref[...],
                preferred_element_type=jnp.float32) + b2_ref[...]
    h = jnp.maximum(h, 0.0)

    # Head: Linear(H2 -> 1), no final activation.  Only the real column is
    # stored / DMA'd back to HBM.
    out_ref[...] = (jnp.dot(h.astype(jnp.bfloat16), w3_ref[...],
                            preferred_element_type=jnp.float32) + b3_ref[...])


def _round_up(x, m):
    return ((x + m - 1) // m) * m


def prepare_params(params):
    """One-time prep, hoisted OUT of the per-call hot path.

    Casts the matmul weights to bf16 (MXU-native on v5e/v6e/v7x); biases stay
    f32 because they add into the f32 accumulator.  W1 is already the full
    stacked [state-rows; action-rows] matrix so layer 1 is a single matmul.
    """
    bf16 = lambda w: w.astype(jnp.bfloat16)
    return dict(w1=bf16(params["w1"]), b1=params["b1"],
                w2=bf16(params["w2"]), b2=params["b2"],
                w3=bf16(params["w3"]), b3=params["b3"])


def qnetwork_forward(state, action, prep, *, tb=1024):
    """state: [B, n_obs], action: [B, n_act] (f32), prep: prepare_params(...)
    -> q: [B, 1] f32."""
    B, n_obs = state.shape
    n_act = action.shape[1]
    n_in = n_obs + n_act

    # Batch tile:
    #   * B % 16 == 0 and fits in two tiles -> exactly 2 parallel grid steps
    #     (so v7x's two TensorCores both get work), no padding.
    #   * otherwise stream in tb-row tiles; padding only triggers for ragged
    #     batch sizes (extra HBM pass), never for power-of-two batches.
    if B % 16 == 0 and B // 2 <= tb:
        TB = max(B // 2, 8)
    elif B <= 8:
        TB = _round_up(B, 8)
    else:
        TB = min(tb, _round_up(B, 8))
    B_pad = _round_up(B, TB)
    if B_pad != B:  # ragged-tail fallback only
        pad = ((0, B_pad - B), (0, 0))
        state = jnp.pad(state, pad)
        action = jnp.pad(action, pad)

    weights = (prep["w1"], prep["b1"], prep["w2"], prep["b2"],
               prep["w3"], prep["b3"])

    # Activations: tiled along the batch grid.
    act_spec = lambda f: pl.BlockSpec((TB, f), lambda i: (i, 0))
    # Weights/biases: full block, constant index_map -> VMEM-resident across
    # all batch-grid iterations (no re-DMA).
    res_spec = lambda a: pl.BlockSpec(a.shape, lambda i: (0, 0))

    out = pl.pallas_call(
        qnetwork_kernel,
        out_shape=jax.ShapeDtypeStruct((B_pad, 1), jnp.float32),
        grid=(B_pad // TB,),
        in_specs=[act_spec(n_obs), act_spec(n_act)]
                 + [res_spec(w) for w in weights],
        out_specs=pl.BlockSpec((TB, 1), lambda i: (i, 0)),
        scratch_shapes=[pltpu.VMEM((TB, n_in), jnp.float32)],
        compiler_params=pltpu.CompilerParams(
            dimension_semantics=("parallel",)),
    )(state, action, *weights)

    return out[:B]


def init_params(key, n_obs, n_act, hidden=(64, 32)):
    """PyTorch nn.Linear-style U(-1/sqrt(fan_in), 1/sqrt(fan_in)) init.

    Weights are stored [in_features, out_features] (transpose of torch's
    [out, in]) so the kernel computes x @ W + b.
    """
    h1, h2 = hidden
    ks = jax.random.split(key, 6)

    def lin(kw, kb, fan_in, fan_out):
        bound = 1.0 / jnp.sqrt(float(fan_in))
        w = jax.random.uniform(kw, (fan_in, fan_out), jnp.float32, -bound, bound)
        b = jax.random.uniform(kb, (1, fan_out), jnp.float32, -bound, bound)
        return w, b

    w1, b1 = lin(ks[0], ks[1], n_obs + n_act, h1)
    w2, b2 = lin(ks[2], ks[3], h1, h2)
    w3, b3 = lin(ks[4], ks[5], h2, 1)
    return dict(w1=w1, b1=b1, w2=w2, b2=b2, w3=w3, b3=b3)


def reference_forward(state, action, p):
    """Pure-JAX reference with the same bf16-operand / f32-accumulate math."""
    # TODO(synk): vs a true all-f32 PyTorch QNetwork the bf16 operands add
    # error that grows with unnormalized observation magnitudes; keep layer-1
    # LHS in f32 if this ever feeds tight TD-target tolerances.
    bf = lambda t: t.astype(jnp.bfloat16)
    x = jnp.concatenate([state, action], axis=1)
    h = jnp.maximum(
        jnp.dot(bf(x), bf(p["w1"]), preferred_element_type=jnp.float32)
        + p["b1"], 0.0)
    h = jnp.maximum(
        jnp.dot(bf(h), bf(p["w2"]), preferred_element_type=jnp.float32)
        + p["b2"], 0.0)
    return (jnp.dot(bf(h), bf(p["w3"]), preferred_element_type=jnp.float32)
            + p["b3"])


if __name__ == "__main__":
    # Small, TPU-friendly demo shapes: batch=8, n_obs=32, n_actions=8,
    # hidden_sizes=(64, 32) as in the module defaults.
    B, N_OBS, N_ACT = 8, 32, 8
    HIDDEN = (64, 32)

    key = jax.random.PRNGKey(0)
    k_s, k_a, k_p = jax.random.split(key, 3)
    state = jax.random.normal(k_s, (B, N_OBS), jnp.float32)
    action = jax.random.normal(k_a, (B, N_ACT), jnp.float32)

    params = init_params(k_p, N_OBS, N_ACT, HIDDEN)
    prepared = prepare_params(params)   # one-time; hoisted off the hot path

    q = qnetwork_forward(state, action, prepared)
    jax.block_until_ready(q)

    q_ref = reference_forward(state, action, params)
    assert q.shape == (B, 1), q.shape
    # bf16 matmul operands -> relaxed tolerance vs the matched-precision ref.
    max_err = float(jnp.max(jnp.abs(q - q_ref)))
    assert jnp.allclose(q, q_ref, atol=1e-2, rtol=1e-2), max_err

    print("KERNEL_OK")
</pallas_src>

<mosaic_0001>
module attributes {stable_mosaic.version = 11 : i64} {
  func.func @qnetwork_kernel(%arg0: i32, %arg1: memref<8x32xf32, #tpu.memory_space<vmem>>, %arg2: memref<8x8xf32, #tpu.memory_space<vmem>>, %arg3: memref<40x64xbf16, #tpu.memory_space<vmem>>, %arg4: memref<1x64xf32, #tpu.memory_space<vmem>>, %arg5: memref<64x32xbf16, #tpu.memory_space<vmem>>, %arg6: memref<1x32xf32, #tpu.memory_space<vmem>>, %arg7: memref<32x1xbf16, #tpu.memory_space<vmem>>, %arg8: memref<1x1xf32, #tpu.memory_space<vmem>>, %arg9: memref<8x1xf32, #tpu.memory_space<vmem>>, %arg10: memref<8x40xf32, #tpu.memory_space<vmem>>) attributes {dimension_semantics = [#tpu.dimension_semantics<parallel>], iteration_bounds = array<i64: 1>, scalar_prefetch = 0 : i64, scratch_operands = 1 : i64, tpu.core_type = #tpu.core_type<tc>, window_params = [{transform_indices = @transform_0, window_bounds = array<i64: 8, 32>}, {transform_indices = @transform_1, window_bounds = array<i64: 8, 8>}, {pipeline_mode = #tpu.pipeline_mode<synchronous>, transform_indices = @transform_2, window_bounds = array<i64: 40, 64>}, {pipeline_mode = #tpu.pipeline_mode<synchronous>, transform_indices = @transform_3, window_bounds = array<i64: 1, 64>}, {pipeline_mode = #tpu.pipeline_mode<synchronous>, transform_indices = @transform_4, window_bounds = array<i64: 64, 32>}, {pipeline_mode = #tpu.pipeline_mode<synchronous>, transform_indices = @transform_5, window_bounds = array<i64: 1, 32>}, {pipeline_mode = #tpu.pipeline_mode<synchronous>, transform_indices = @transform_6, window_bounds = array<i64: 32, 1>}, {pipeline_mode = #tpu.pipeline_mode<synchronous>, transform_indices = @transform_7, window_bounds = array<i64: 1, 1>}, {transform_indices = @transform_8, window_bounds = array<i64: 8, 1>}]} {
    %c0 = arith.constant 0 : index
    %c0_0 = arith.constant 0 : index
    %0 = vector.load %arg1[%c0, %c0_0] : memref<8x32xf32, #tpu.memory_space<vmem>>, vector<8x32xf32>
    %c0_1 = arith.constant 0 : index
    %c0_2 = arith.constant 0 : index
    %1 = vector.load %arg10[%c0_1, %c0_2] : memref<8x40xf32, #tpu.memory_space<vmem>>, vector<8x32xf32>
    tpu.vector_store %arg10[%c0_1, %c0_2], %0 {strides = array<i32>} : memref<8x40xf32, #tpu.memory_space<vmem>>, vector<8x32xf32>,
    %c0_3 = arith.constant 0 : index
    %c0_4 = arith.constant 0 : index
    %2 = vector.load %arg2[%c0_3, %c0_4] : memref<8x8xf32, #tpu.memory_space<vmem>>, vector<8x8xf32>
    %c0_5 = arith.constant 0 : index
    %c32 = arith.constant 32 : index
    %3 = vector.load %arg10[%c0_5, %c32] : memref<8x40xf32, #tpu.memory_space<vmem>>, vector<8x8xf32>
    tpu.vector_store %arg10[%c0_5, %c32], %2 {strides = array<i32>} : memref<8x40xf32, #tpu.memory_space<vmem>>, vector<8x8xf32>,
    %c0_6 = arith.constant 0 : index
    %c0_7 = arith.constant 0 : index
    %4 = vector.load %arg10[%c0_6, %c0_7] : memref<8x40xf32, #tpu.memory_space<vmem>>, vector<8x40xf32>
    %5 = arith.truncf %4 : vector<8x40xf32> to vector<8x40xbf16>
    %c0_8 = arith.constant 0 : index
    %c0_9 = arith.constant 0 : index
    %6 = vector.load %arg3[%c0_8, %c0_9] : memref<40x64xbf16, #tpu.memory_space<vmem>>, vector<40x64xbf16>
    %cst = arith.constant dense<0.000000e+00> : vector<8x64xf32>
    %7 = tpu.matmul %5, %6, %cst {dimension_numbers = #tpu.dot_dimension_numbers<[1], [0], [0], [1], [0, 0, 1, 1], [], []>} : vector<8x40xbf16>, vector<40x64xbf16>, vector<8x64xf32> -> vector<8x64xf32>
    %c0_10 = arith.constant 0 : index
    %c0_11 = arith.constant 0 : index
    %8 = vector.load %arg4[%c0_10, %c0_11] : memref<1x64xf32, #tpu.memory_space<vmem>>, vector<1x64xf32>
    %9 = vector.broadcast %8 : vector<1x64xf32> to vector<8x64xf32>
    %10 = arith.addf %7, %9 : vector<8x64xf32>
    %cst_12 = arith.constant 0.000000e+00 : f32
    %11 = vector.broadcast %cst_12 : f32 to vector<8x64xf32>
    %12 = arith.maximumf %10, %11 : vector<8x64xf32>
    %13 = arith.truncf %12 : vector<8x64xf32> to vector<8x64xbf16>
    %c0_13 = arith.constant 0 : index
    %c0_14 = arith.constant 0 : index
    %14 = vector.load %arg5[%c0_13, %c0_14] : memref<64x32xbf16, #tpu.memory_space<vmem>>, vector<64x32xbf16>
    %cst_15 = arith.constant dense<0.000000e+00> : vector<8x32xf32>
    %15 = tpu.matmul %13, %14, %cst_15 {dimension_numbers = #tpu.dot_dimension_numbers<[1], [0], [0], [1], [0, 0, 1, 1], [], []>} : vector<8x64xbf16>, vector<64x32xbf16>, vector<8x32xf32> -> vector<8x32xf32>
    %c0_16 = arith.constant 0 : index
    %c0_17 = arith.constant 0 : index
    %16 = vector.load %arg6[%c0_16, %c0_17] : memref<1x32xf32, #tpu.memory_space<vmem>>, vector<1x32xf32>
    %17 = vector.broadcast %16 : vector<1x32xf32> to vector<8x32xf32>
    %18 = arith.addf %15, %17 : vector<8x32xf32>
    %cst_18 = arith.constant 0.000000e+00 : f32
    %19 = vector.broadcast %cst_18 : f32 to vector<8x32xf32>
    %20 = arith.maximumf %18, %19 : vector<8x32xf32>
    %21 = arith.truncf %20 : vector<8x32xf32> to vector<8x32xbf16>
    %c0_19 = arith.constant 0 : index
    %c0_20 = arith.constant 0 : index
    %22 = vector.load %arg7[%c0_19, %c0_20] : memref<32x1xbf16, #tpu.memory_space<vmem>>, vector<32x1xbf16>
    %cst_21 = arith.constant dense<0.000000e+00> : vector<8x1xf32>
    %23 = tpu.matmul %21, %22, %cst_21 {dimension_numbers = #tpu.dot_dimension_numbers<[1], [0], [0], [1], [0, 0, 1, 1], [], []>} : vector<8x32xbf16>, vector<32x1xbf16>, vector<8x1xf32> -> vector<8x1xf32>
    %c0_22 = arith.constant 0 : index
    %c0_23 = arith.constant 0 : index
    %24 = vector.load %arg8[%c0_22, %c0_23] : memref<1x1xf32, #tpu.memory_space<vmem>>, vector<1x1xf32>
    %25 = vector.broadcast %24 : vector<1x1xf32> to vector<8x1xf32>
    %26 = arith.addf %23, %25 : vector<8x1xf32>
    %c0_24 = arith.constant 0 : index
    %c0_25 = arith.constant 0 : index
    %27 = vector.load %arg9[%c0_24, %c0_25] : memref<8x1xf32, #tpu.memory_space<vmem>>, vector<8x1xf32>
    tpu.vector_store %arg9[%c0_24, %c0_25], %26 {strides = array<i32>} : memref<8x1xf32, #tpu.memory_space<vmem>>, vector<8x1xf32>,
    return
  }
  func.func @transform_0(%arg0: i32) -> (i32, i32) {
    %c0_i32 = arith.constant 0 : i32
    %c0_i32_0 = arith.constant 0 : i32
    return %arg0, %c0_i32 : i32, i32
  }
  func.func @transform_1(%arg0: i32) -> (i32, i32) {
    %c0_i32 = arith.constant 0 : i32
    %c0_i32_0 = arith.constant 0 : i32
    return %arg0, %c0_i32 : i32, i32
  }
  func.func @transform_2(%arg0: i32) -> (i32, i32) {
    %c0_i32 = arith.constant 0 : i32
    %c0_i32_0 = arith.constant 0 : i32
    %c0_i32_1 = arith.constant 0 : i32
    return %c0_i32, %c0_i32_0 : i32, i32
  }
  func.func @transform_3(%arg0: i32) -> (i32, i32) {
    %c0_i32 = arith.constant 0 : i32
    %c0_i32_0 = arith.constant 0 : i32
    %c0_i32_1 = arith.constant 0 : i32
    return %c0_i32, %c0_i32_0 : i32, i32
  }
  func.func @transform_4(%arg0: i32) -> (i32, i32) {
    %c0_i32 = arith.constant 0 : i32
    %c0_i32_0 = arith.constant 0 : i32
    %c0_i32_1 = arith.constant 0 : i32
    return %c0_i32, %c0_i32_0 : i32, i32
  }
  func.func @transform_5(%arg0: i32) -> (i32, i32) {
    %c0_i32 = arith.constant 0 : i32
    %c0_i32_0 = arith.constant 0 : i32
    %c0_i32_1 = arith.constant 0 : i32
    return %c0_i32, %c0_i32_0 : i32, i32
  }
  func.func @transform_6(%arg0: i32) -> (i32, i32) {
    %c0_i32 = arith.constant 0 : i32
    %c0_i32_0 = arith.constant 0 : i32
    %c0_i32_1 = arith.constant 0 : i32
    return %c0_i32, %c0_i32_0 : i32, i32
  }
  func.func @transform_7(%arg0: i32) -> (i32, i32) {
    %c0_i32 = arith.constant 0 : i32
    %c0_i32_0 = arith.constant 0 : i32
    %c0_i32_1 = arith.constant 0 : i32
    return %c0_i32, %c0_i32_0 : i32, i32
  }
  func.func @transform_8(%arg0: i32) -> (i32, i32) {
    %c0_i32 = arith.constant 0 : i32
    %c0_i32_0 = arith.constant 0 : i32
    return %arg0, %c0_i32 : i32, i32
  }
}

</mosaic_0001>

<llo_original>
// kernel: tpu_custom_call.1
$region0: #{tpu_custom_call.1}
  #allocation0 [shape = 'u32[]', space=smem, size = 0x4, offset = 0x4, fixed_abs, tag = 'smem constant byte address 0x4 - core index']
  #allocation1 [shape = 'u32[72,128]{1,0:T(1,128)}', space=vmem, size = 0x9000, scoped, tag = 'internal scratch']
  #allocation2 [shape = 'f32[8,40]{1,0:T(8,128)}', space=vmem, size = 0x1000, scoped, tag = 'scratch operand']
  #allocation3 [shape = 'f32[1,1]{1,0:T(1,128)S(1)}', space=vmem, size = 0x200, scoped, tag = 'scoped memory for tpu_custom_call.1']
  %s0 = inlined_call_operand.vmem [shape: f32[8,32], index: 0, kind: input, shape index: {}]
  %s1 = inlined_call_operand.vmem [shape: f32[8,8], index: 1, kind: input, shape index: {}]
  %s2 = inlined_call_operand.vmem [shape: bf16[40,64], index: 2, kind: input, shape index: {}]
  %s3 = inlined_call_operand.vmem [shape: f32[1,64], index: 3, kind: input, shape index: {}]
  %s4 = inlined_call_operand.vmem [shape: bf16[64,32], index: 4, kind: input, shape index: {}]
  %s5 = inlined_call_operand.vmem [shape: f32[1,32], index: 5, kind: input, shape index: {}]
  %s6 = inlined_call_operand.vmem [shape: bf16[32,1], index: 6, kind: input, shape index: {}]
  %s7 = inlined_call_operand.<no memory space> [shape: f32[1,1], index: 7, kind: input, shape index: {}]
  %s8 = inlined_call_operand.vmem [shape: f32[8,1], index: 8, kind: output, shape index: {}]
  %s9 = sld [smem:[#allocation0]]
  $region42: #{tpu_custom_call.1} parent=0
    _
  %s11 = ssub.s32 1, %s9
  %s12 = scalar_select 0, %s11, %s9
  %v13 = vstv %s7
  %14 = vst [vmem:[#allocation3] sm:$0x1] %v13
  // Predicated region
  $region2: #{tpu_custom_call.1} parent=0 // pred_check
    _
  $region3: #{tpu_custom_call.1} parent=0 // pred_check_branch
    %16 = sbr.rel (0) target = $region5
  $region4: #{tpu_custom_call.1} parent=0 // pred_region
    _
  $region5: #{tpu_custom_call.1} parent=0 // pred_fallthru
    _
  // Predicated region
  $region6: #{tpu_custom_call.1} parent=0 // pred_check
    _
  $region7: #{tpu_custom_call.1} parent=0 // pred_check_branch
    %18 = sbr.rel (0) target = $region9
  $region8: #{tpu_custom_call.1} parent=0 // pred_region
    _
  $region9: #{tpu_custom_call.1} parent=0 // pred_fallthru
    _
  // Predicated region
  $region10: #{tpu_custom_call.1} parent=0 // pred_check
    _
  $region11: #{tpu_custom_call.1} parent=0 // pred_check_branch
    %20 = sbr.rel (0) target = $region13
  $region12: #{tpu_custom_call.1} parent=0 // pred_region
    _
  $region13: #{tpu_custom_call.1} parent=0 // pred_fallthru
    _
  // Predicated region
  $region14: #{tpu_custom_call.1} parent=0 // pred_check
    _
  $region15: #{tpu_custom_call.1} parent=0 // pred_check_branch
    %22 = sbr.rel (0) target = $region17
  $region16: #{tpu_custom_call.1} parent=0 // pred_region
    _
  $region17: #{tpu_custom_call.1} parent=0 // pred_fallthru
    _
  // Predicated region
  $region18: #{tpu_custom_call.1} parent=0 // pred_check
    _
  $region19: #{tpu_custom_call.1} parent=0 // pred_check_branch
    %24 = sbr.rel (0) target = $region21
  $region20: #{tpu_custom_call.1} parent=0 // pred_region
    _
  $region21: #{tpu_custom_call.1} parent=0 // pred_fallthru
    _
  // Predicated region
  $region22: #{tpu_custom_call.1} parent=0 // pred_check
    _
  $region23: #{tpu_custom_call.1} parent=0 // pred_check_branch
    %26 = sbr.rel (0) target = $region25
  $region24: #{tpu_custom_call.1} parent=0 // pred_region
    _
  $region25: #{tpu_custom_call.1} parent=0 // pred_fallthru
    _
  // Predicated region
  $region26: #{tpu_custom_call.1} parent=0 // pred_check
    _
  $region27: #{tpu_custom_call.1} parent=0 // pred_check_branch
    %28 = sbr.rel (0) target = $region29
  $region28: #{tpu_custom_call.1} parent=0 // pred_region
    _
  $region29: #{tpu_custom_call.1} parent=0 // pred_fallthru
    _
  // Predicated region
  $region30: #{tpu_custom_call.1} parent=0 // pred_check
    _
  $region31: #{tpu_custom_call.1} parent=0 // pred_check_branch
    %30 = sbr.rel (0) target = $region33
  $region32: #{tpu_custom_call.1} parent=0 // pred_region
    _
  $region33: #{tpu_custom_call.1} parent=0 // pred_fallthru
    _
  %v32 = vld [vmem:[%s0] sm:$0xff]
  %vm33 = vcmask 261120
  %34 = vst.msk [vmem:[#allocation2] sm:$0xff] %vm33, %v32
  %v35 = vld [vmem:[%s1] sm:$0xff]
  %37 = vrot.lane.b32.xlu0 %v35, 32
  %v38 = vpop.permute.xlu0 %37
  %vm40 = vcmask 326912
  %41 = vst.msk [vmem:[#allocation2] sm:$0xff] %vm40, %v38
  %v42 = vld [vmem:[#allocation2] sm:$0xff]
  %v43 = vpack.c.bf16 %v42, %v42
  %v44 = vld [vmem:[%s2] sm:$0xf]
  %v45 = vld [vmem:[%s2 + $0x4] sm:$0xf]
  %v46 = vld [vmem:[%s2 + $0x8] sm:$0xf]
  %v47 = vld [vmem:[%s2 + $0xc] sm:$0xf]
  %v48 = vld [vmem:[%s2 + $0x10] sm:$0xf]
  %v49 = vld [vmem:[%s3] sm:$0x1]
  %v51 = vperm.slane %v49, 0
  %v58 = vunpack.c.l.b16 %v44
  %v59 = vunpack.c.l.b16 %v45
  %v60 = vunpack.c.l.b16 %v46
  %v61 = vunpack.c.l.b16 %v47
  %v62 = vunpack.c.l.b16 %v48
  %v63 = vpack.c.b16 %v59, %v58
  %v64 = vpack.c.b16 %v61, %v60
  %v65 = vpack.c.b16 %v62, %v62
  %vm68 = vcmask 326656
  %v70 = vsel %vm68, %v43, 0
  %vm72 = vcmask 1043456
  %v74 = vsel %vm72, %v65, 0
  %76 = vmatpush.bf16.msra.mxu0 0
  %77 = vmatpush.bf16.msra.mxu0 0
  %78 = vmatpush.bf16.msra.mxu0 0
  %79 = vmatpush.bf16.msra.mxu0 0
  %80 = vmatpush.bf16.msra.mxu0 0
  %81 = vmatpush.bf16.msra.mxu0 %v74
  %82 = vmatpush.bf16.msra.mxu0 %v64
  %83 = vmatpush.bf16.msra.mxu0 %v63
  %84 = vmatmul.bf16.gmra.mxu0 %v70
  %v85 = vpop.f32.mrf.mxu0
  %v86 = vadd.f32 %v51, %v85
  %v87 = vpop.f32.mrf.mxu0
  %88 = vdwg.mxu0
  %v89 = vmax.f32 %v86, 0.0
  %v90 = vpack.c.bf16 %v89, %v89
  %v91 = vld [vmem:[%s4] sm:$0xf]
  %v92 = vld [vmem:[%s4 + $0x4] sm:$0xf]
  %v93 = vld [vmem:[%s4 + $0x8] sm:$0xf]
  %v94 = vld [vmem:[%s4 + $0xc] sm:$0xf]
  %v95 = vld [vmem:[%s4 + $0x10] sm:$0xf]
  %v96 = vld [vmem:[%s4 + $0x14] sm:$0xf]
  %v97 = vld [vmem:[%s4 + $0x18] sm:$0xf]
  %v98 = vld [vmem:[%s4 + $0x1c] sm:$0xf]
  %v99 = vld [vmem:[%s5] sm:$0x1]
  %v101 = vperm.slane %v99, 0
  %v111 = vunpack.c.l.b16 %v91
  %v112 = vunpack.c.l.b16 %v92
  %v113 = vunpack.c.l.b16 %v93
  %v114 = vunpack.c.l.b16 %v94
  %v115 = vunpack.c.l.b16 %v95
  %v116 = vunpack.c.l.b16 %v96
  %v117 = vunpack.c.l.b16 %v97
  %v118 = vunpack.c.l.b16 %v98
  %v119 = vpack.c.b16 %v112, %v111
  %v120 = vpack.c.b16 %v114, %v113
  %v121 = vpack.c.b16 %v116, %v115
  %v122 = vpack.c.b16 %v118, %v117
  %vm127 = vcmask 523264
  %v129 = vsel %vm127, %v90, 0
  %131 = vmatpush.bf16.msra.mxu0 0
  %132 = vmatpush.bf16.msra.mxu0 0
  %133 = vmatpush.bf16.msra.mxu0 0
  %134 = vmatpush.bf16.msra.mxu0 0
  %135 = vmatpush.bf16.msra.mxu0 %v122
  %136 = vmatpush.bf16.msra.mxu0 %v121
  %137 = vmatpush.bf16.msra.mxu0 %v120
  %138 = vmatpush.bf16.msra.mxu0 %v119
  %139 = vmatmul.bf16.gmra.mxu0 %v129
  %v140 = vpop.f32.mrf.mxu0
  %v141 = vadd.f32 %v101, %v140
  %v142 = vpop.f32.mrf.mxu0
  %143 = vdwg.mxu0
  %v144 = vmax.f32 %v141, 0.0
  %v145 = vpack.c.bf16 %v144, %v144
  %v146 = vld [vmem:[%s6] sm:$0xf]
  %v147 = vld [vmem:[%s6 + $0x4] sm:$0xf]
  %v148 = vld [vmem:[%s6 + $0x8] sm:$0xf]
  %v149 = vld [vmem:[%s6 + $0xc] sm:$0xf]
  %v150 = vld [vmem:[#allocation3] sm:$0x1]
  %v152 = vperm.slane %v150, 0
  %v158 = vunpack.c.l.b16 %v146
  %v159 = vunpack.c.l.b16 %v147
  %v160 = vunpack.c.l.b16 %v148
  %v161 = vunpack.c.l.b16 %v149
  %v162 = vpack.c.b16 %v159, %v158
  %v163 = vpack.c.b16 %v161, %v160
  %v167 = vsel %vm33, %v145, 0
  %169 = vmatpush.bf16.msra.mxu0 0
  %170 = vmatpush.bf16.msra.mxu0 0
  %171 = vmatpush.bf16.msra.mxu0 0
  %172 = vmatpush.bf16.msra.mxu0 0
  %173 = vmatpush.bf16.msra.mxu0 0
  %174 = vmatpush.bf16.msra.mxu0 0
  %175 = vmatpush.bf16.msra.mxu0 %v163
  %176 = vmatpush.bf16.msra.mxu0 %v162
  %177 = vmatmul.bf16.gmra.mxu0 %v167
  %v178 = vpop.f32.mrf.mxu0
  %v179 = vadd.f32 %v152, %v178
  %v180 = vpop.f32.mrf.mxu0
  %181 = vdwg.mxu0
  %vm182 = vcmask 7168
  %183 = vst.msk [vmem:[%s8] sm:$0xff] %vm182, %v179
  // Predicated region
  $region34: #{tpu_custom_call.1} parent=0 // pred_check
    _
  $region35: #{tpu_custom_call.1} parent=0 // pred_check_branch
    %185 = sbr.rel (0) target = $region37
  $region36: #{tpu_custom_call.1} parent=0 // pred_region
    _
  $region37: #{tpu_custom_call.1} parent=0 // pred_fallthru
    _
  // Predicated region
  $region38: #{tpu_custom_call.1} parent=0 // pred_check
    _
  $region39: #{tpu_custom_call.1} parent=0 // pred_check_branch
    %187 = sbr.rel (0) target = $region41
  $region40: #{tpu_custom_call.1} parent=0 // pred_region
    _
  $region41: #{tpu_custom_call.1} parent=0 // pred_fallthru
    _

</llo_original>
